<compile_context>
chip_gen: v7x
topology: tpu7x:2x2x1
jax: 0.10.0
libtpu: 0.0.40
codegen_flags: <defaults>
</compile_context>

<pallas_src>
import jax
import jax.numpy as jnp
from jax.experimental import pallas as pl
from jax.experimental.pallas import tpu as pltpu


def attention_fusion_kernel(x_ref, y_ref, w1_ref, b1_ref, w2_ref, b2_ref,
                            o_ref):
    """One (image, pixel-tile) grid step.

    x_ref, y_ref, o_ref : (C, TP)  channels on sublanes, pixels on lanes
    w1_ref, w2_ref      : (C, C)   BN-scale-folded conv weights (out = W @ in)
    b1_ref, b2_ref      : (C, 1)   folded BatchNorm shifts
    """
    x = x_ref[...]
    y = y_ref[...]
    w1 = w1_ref[...]
    w2 = w2_ref[...]
    b1 = b1_ref[...]
    b2 = b2_ref[...]

    def attn(t):
        h = jnp.dot(w1, t, preferred_element_type=jnp.float32)
        h = jnp.maximum(h + b1, 0.0)                      # BN1 (folded) + ReLU
        h = jnp.dot(w2, h, preferred_element_type=jnp.float32)
        return jnp.maximum(h + b2, 0.0)                   # BN2 (folded) + ReLU

    o_ref[...] = (x * attn(x) + y * attn(y)).astype(o_ref.dtype)


def _round_up(a, b):
    return pl.cdiv(a, b) * b


def attention_fusion(x_nchw, y_nchw, params, *, tile_p=None,
                     vmem_io_budget=8 * 1024 * 1024):
    """x_nchw, y_nchw: (N, C, H, W) float32.  Returns (N, C, H, W)."""
    N, C, H, W = x_nchw.shape
    HW = H * W
    eps = 1e-5

    # ---- Fold eval-mode BatchNorm into the conv weights / a per-channel shift.
    s1 = params["g1"] * jax.lax.rsqrt(params["rv1"] + eps)     # (C,)
    s2 = params["g2"] * jax.lax.rsqrt(params["rv2"] + eps)
    b1 = (params["b1"] - params["rm1"] * s1).reshape(C, 1)     # (C, 1)
    b2 = (params["b2"] - params["rm2"] * s2).reshape(C, 1)
    w1_eff = params["w1"] * s1[:, None]                        # (C_out, C_in)
    w2_eff = params["w2"] * s2[:, None]

    # ---- Native NCHW -> (N, C, HW): free reshape, no transpose / HBM traffic.
    x3 = x_nchw.reshape(N, C, HW)
    y3 = y_nchw.reshape(N, C, HW)

    # ---- Pick the largest lane-dense pixel tile that fits the VMEM budget.
    # Per pixel column: 3 IO arrays x 2 pipeline buffers x C rows x 4 bytes.
    if tile_p is None:
        per_pixel_bytes = 3 * 2 * C * 4
        tile_p = (vmem_io_budget // per_pixel_bytes) // 128 * 128
        tile_p = min(tile_p, 16384)
    tp = max(128, (int(tile_p) // 128) * 128)
    tp = min(tp, _round_up(HW, 128))

    # Partial final tile (HW % tp != 0) is handled by Pallas clamping the edge
    # block DMAs; lanes are independent so no padding / slicing is needed.
    grid = (N, pl.cdiv(HW, tp))

    io_spec = pl.BlockSpec((None, C, tp), lambda n, p: (n, 0, p))
    w_spec = pl.BlockSpec((C, C), lambda n, p: (0, 0))
    b_spec = pl.BlockSpec((C, 1), lambda n, p: (0, 0))

    # 2 branches x 2 conv layers x (2*C*C flops per pixel) = 8*C*C per pixel.
    cost = pl.CostEstimate(
        flops=8 * C * C * N * HW,
        transcendentals=0,
        bytes_accessed=12 * C * N * HW,   # x + y + out in f32
    )

    out3 = pl.pallas_call(
        attention_fusion_kernel,
        out_shape=jax.ShapeDtypeStruct((N, C, HW), x3.dtype),
        grid=grid,
        in_specs=[io_spec, io_spec, w_spec, b_spec, w_spec, b_spec],
        out_specs=io_spec,
        compiler_params=pltpu.CompilerParams(
            dimension_semantics=("parallel", "parallel")),
        cost_estimate=cost,
    )(x3, y3, w1_eff, b1, w2_eff, b2)

    return out3.reshape(N, C, H, W)


def attention_fusion_ref(x_nchw, y_nchw, params):
    """Pure-JAX reference (eval-mode BN), NCHW."""
    eps = 1e-5

    def attn(t):
        h = jnp.einsum("oi,nihw->nohw", params["w1"], t)
        h = (h - params["rm1"][None, :, None, None]) / jnp.sqrt(
            params["rv1"][None, :, None, None] + eps)
        h = h * params["g1"][None, :, None, None] + params["b1"][None, :, None, None]
        h = jnp.maximum(h, 0.0)
        h = jnp.einsum("oi,nihw->nohw", params["w2"], h)
        h = (h - params["rm2"][None, :, None, None]) / jnp.sqrt(
            params["rv2"][None, :, None, None] + eps)
        h = h * params["g2"][None, :, None, None] + params["b2"][None, :, None, None]
        h = jnp.maximum(h, 0.0)
        return h

    return x_nchw * attn(x_nchw) + y_nchw * attn(y_nchw)


def init_params(key, C):
    ks = jax.random.split(key, 8)
    # Conv2d(C, C, 1, bias=False) weight shape (C_out, C_in, 1, 1) -> (C_out, C_in)
    w1 = jax.random.normal(ks[0], (C, C), jnp.float32) * 0.1
    w2 = jax.random.normal(ks[1], (C, C), jnp.float32) * 0.1
    g1 = 1.0 + 0.1 * jax.random.normal(ks[2], (C,), jnp.float32)
    b1 = 0.1 * jax.random.normal(ks[3], (C,), jnp.float32)
    g2 = 1.0 + 0.1 * jax.random.normal(ks[4], (C,), jnp.float32)
    b2 = 0.1 * jax.random.normal(ks[5], (C,), jnp.float32)
    rm1 = 0.05 * jax.random.normal(ks[6], (C,), jnp.float32)
    rv1 = 0.5 + jnp.abs(0.3 * jax.random.normal(ks[7], (C,), jnp.float32))
    rm2 = jnp.zeros((C,), jnp.float32)
    rv2 = jnp.ones((C,), jnp.float32)
    return dict(w1=w1, w2=w2, g1=g1, b1=b1, g2=g2, b2=b2,
                rm1=rm1, rv1=rv1, rm2=rm2, rv2=rv2)


if __name__ == "__main__":
    N, C, H, W = 2, 32, 16, 16
    key = jax.random.PRNGKey(0)
    kx, ky, kp = jax.random.split(key, 3)
    x = jax.random.normal(kx, (N, C, H, W), jnp.float32)
    y = jax.random.normal(ky, (N, C, H, W), jnp.float32)
    params = init_params(kp, C)

    out = attention_fusion(x, y, params)
    out = jax.block_until_ready(out)

    ref = attention_fusion_ref(x, y, params)
    assert out.shape == (N, C, H, W)
    assert jnp.allclose(out, ref, atol=1e-4, rtol=1e-4), float(
        jnp.max(jnp.abs(out - ref)))

    print("KERNEL_OK")
</pallas_src>

<mosaic_0001>
module attributes {stable_mosaic.version = 11 : i64} {
  func.func @attention_fusion_kernel(%arg0: i32, %arg1: i32, %arg2: memref<1x32x256xf32, #tpu.memory_space<vmem>>, %arg3: memref<1x32x256xf32, #tpu.memory_space<vmem>>, %arg4: memref<32x32xf32, #tpu.memory_space<vmem>>, %arg5: memref<32x1xf32, #tpu.memory_space<vmem>>, %arg6: memref<32x32xf32, #tpu.memory_space<vmem>>, %arg7: memref<32x1xf32, #tpu.memory_space<vmem>>, %arg8: memref<1x32x256xf32, #tpu.memory_space<vmem>>) attributes {dimension_semantics = [#tpu.dimension_semantics<parallel>, #tpu.dimension_semantics<parallel>], iteration_bounds = array<i64: 2, 1>, scalar_prefetch = 0 : i64, scratch_operands = 0 : i64, tpu.core_type = #tpu.core_type<tc>, window_params = [{transform_indices = @transform_0, window_bounds = array<i64: 1, 32, 256>}, {transform_indices = @transform_1, window_bounds = array<i64: 1, 32, 256>}, {pipeline_mode = #tpu.pipeline_mode<synchronous>, transform_indices = @transform_2, window_bounds = array<i64: 32, 32>}, {pipeline_mode = #tpu.pipeline_mode<synchronous>, transform_indices = @transform_3, window_bounds = array<i64: 32, 1>}, {pipeline_mode = #tpu.pipeline_mode<synchronous>, transform_indices = @transform_4, window_bounds = array<i64: 32, 32>}, {pipeline_mode = #tpu.pipeline_mode<synchronous>, transform_indices = @transform_5, window_bounds = array<i64: 32, 1>}, {transform_indices = @transform_6, window_bounds = array<i64: 1, 32, 256>}]} {
    %c0 = arith.constant 0 : index
    %c0_0 = arith.constant 0 : index
    %c0_1 = arith.constant 0 : index
    %0 = vector.load %arg2[%c0, %c0_0, %c0_1] : memref<1x32x256xf32, #tpu.memory_space<vmem>>, vector<1x32x256xf32>
    %1 = vector.shape_cast %0 : vector<1x32x256xf32> to vector<32x256xf32>
    %c0_2 = arith.constant 0 : index
    %c0_3 = arith.constant 0 : index
    %c0_4 = arith.constant 0 : index
    %2 = vector.load %arg3[%c0_2, %c0_3, %c0_4] : memref<1x32x256xf32, #tpu.memory_space<vmem>>, vector<1x32x256xf32>
    %3 = vector.shape_cast %2 : vector<1x32x256xf32> to vector<32x256xf32>
    %c0_5 = arith.constant 0 : index
    %c0_6 = arith.constant 0 : index
    %4 = vector.load %arg4[%c0_5, %c0_6] : memref<32x32xf32, #tpu.memory_space<vmem>>, vector<32x32xf32>
    %c0_7 = arith.constant 0 : index
    %c0_8 = arith.constant 0 : index
    %5 = vector.load %arg6[%c0_7, %c0_8] : memref<32x32xf32, #tpu.memory_space<vmem>>, vector<32x32xf32>
    %c0_9 = arith.constant 0 : index
    %c0_10 = arith.constant 0 : index
    %6 = vector.load %arg5[%c0_9, %c0_10] : memref<32x1xf32, #tpu.memory_space<vmem>>, vector<32x1xf32>
    %c0_11 = arith.constant 0 : index
    %c0_12 = arith.constant 0 : index
    %7 = vector.load %arg7[%c0_11, %c0_12] : memref<32x1xf32, #tpu.memory_space<vmem>>, vector<32x1xf32>
    %cst = arith.constant dense<0.000000e+00> : vector<32x256xf32>
    %8 = tpu.matmul %4, %1, %cst {dimension_numbers = #tpu.dot_dimension_numbers<[1], [0], [0], [1], [0, 0, 1, 1], [], []>} : vector<32x32xf32>, vector<32x256xf32>, vector<32x256xf32> -> vector<32x256xf32>
    %9 = vector.broadcast %6 : vector<32x1xf32> to vector<32x256xf32>
    %10 = arith.addf %8, %9 : vector<32x256xf32>
    %cst_13 = arith.constant 0.000000e+00 : f32
    %11 = vector.broadcast %cst_13 : f32 to vector<32x256xf32>
    %12 = arith.maximumf %10, %11 : vector<32x256xf32>
    %cst_14 = arith.constant dense<0.000000e+00> : vector<32x256xf32>
    %13 = tpu.matmul %5, %12, %cst_14 {dimension_numbers = #tpu.dot_dimension_numbers<[1], [0], [0], [1], [0, 0, 1, 1], [], []>} : vector<32x32xf32>, vector<32x256xf32>, vector<32x256xf32> -> vector<32x256xf32>
    %14 = vector.broadcast %7 : vector<32x1xf32> to vector<32x256xf32>
    %15 = arith.addf %13, %14 : vector<32x256xf32>
    %cst_15 = arith.constant 0.000000e+00 : f32
    %16 = vector.broadcast %cst_15 : f32 to vector<32x256xf32>
    %17 = arith.maximumf %15, %16 : vector<32x256xf32>
    %18 = arith.mulf %1, %17 : vector<32x256xf32>
    %cst_16 = arith.constant dense<0.000000e+00> : vector<32x256xf32>
    %19 = tpu.matmul %4, %3, %cst_16 {dimension_numbers = #tpu.dot_dimension_numbers<[1], [0], [0], [1], [0, 0, 1, 1], [], []>} : vector<32x32xf32>, vector<32x256xf32>, vector<32x256xf32> -> vector<32x256xf32>
    %20 = vector.broadcast %6 : vector<32x1xf32> to vector<32x256xf32>
    %21 = arith.addf %19, %20 : vector<32x256xf32>
    %cst_17 = arith.constant 0.000000e+00 : f32
    %22 = vector.broadcast %cst_17 : f32 to vector<32x256xf32>
    %23 = arith.maximumf %21, %22 : vector<32x256xf32>
    %cst_18 = arith.constant dense<0.000000e+00> : vector<32x256xf32>
    %24 = tpu.matmul %5, %23, %cst_18 {dimension_numbers = #tpu.dot_dimension_numbers<[1], [0], [0], [1], [0, 0, 1, 1], [], []>} : vector<32x32xf32>, vector<32x256xf32>, vector<32x256xf32> -> vector<32x256xf32>
    %25 = vector.broadcast %7 : vector<32x1xf32> to vector<32x256xf32>
    %26 = arith.addf %24, %25 : vector<32x256xf32>
    %cst_19 = arith.constant 0.000000e+00 : f32
    %27 = vector.broadcast %cst_19 : f32 to vector<32x256xf32>
    %28 = arith.maximumf %26, %27 : vector<32x256xf32>
    %29 = arith.mulf %3, %28 : vector<32x256xf32>
    %30 = arith.addf %18, %29 : vector<32x256xf32>
    %c0_20 = arith.constant 0 : index
    %c0_21 = arith.constant 0 : index
    %c0_22 = arith.constant 0 : index
    %31 = vector.load %arg8[%c0_20, %c0_21, %c0_22] : memref<1x32x256xf32, #tpu.memory_space<vmem>>, vector<1x32x256xf32>
    %32 = vector.shape_cast %31 : vector<1x32x256xf32> to vector<32x256xf32>
    %33 = vector.shape_cast %30 : vector<32x256xf32> to vector<1x32x256xf32>
    tpu.vector_store %arg8[%c0_20, %c0_21, %c0_22], %33 {strides = array<i32>} : memref<1x32x256xf32, #tpu.memory_space<vmem>>, vector<1x32x256xf32>,
    return
  }
  func.func @transform_0(%arg0: i32, %arg1: i32) -> (i32, i32, i32) {
    %c0_i32 = arith.constant 0 : i32
    %c0_i32_0 = arith.constant 0 : i32
    return %arg0, %c0_i32, %arg1 : i32, i32, i32
  }
  func.func @transform_1(%arg0: i32, %arg1: i32) -> (i32, i32, i32) {
    %c0_i32 = arith.constant 0 : i32
    %c0_i32_0 = arith.constant 0 : i32
    return %arg0, %c0_i32, %arg1 : i32, i32, i32
  }
  func.func @transform_2(%arg0: i32, %arg1: i32) -> (i32, i32) {
    %c0_i32 = arith.constant 0 : i32
    %c0_i32_0 = arith.constant 0 : i32
    %c0_i32_1 = arith.constant 0 : i32
    return %c0_i32, %c0_i32_0 : i32, i32
  }
  func.func @transform_3(%arg0: i32, %arg1: i32) -> (i32, i32) {
    %c0_i32 = arith.constant 0 : i32
    %c0_i32_0 = arith.constant 0 : i32
    %c0_i32_1 = arith.constant 0 : i32
    return %c0_i32, %c0_i32_0 : i32, i32
  }
  func.func @transform_4(%arg0: i32, %arg1: i32) -> (i32, i32) {
    %c0_i32 = arith.constant 0 : i32
    %c0_i32_0 = arith.constant 0 : i32
    %c0_i32_1 = arith.constant 0 : i32
    return %c0_i32, %c0_i32_0 : i32, i32
  }
  func.func @transform_5(%arg0: i32, %arg1: i32) -> (i32, i32) {
    %c0_i32 = arith.constant 0 : i32
    %c0_i32_0 = arith.constant 0 : i32
    %c0_i32_1 = arith.constant 0 : i32
    return %c0_i32, %c0_i32_0 : i32, i32
  }
  func.func @transform_6(%arg0: i32, %arg1: i32) -> (i32, i32, i32) {
    %c0_i32 = arith.constant 0 : i32
    %c0_i32_0 = arith.constant 0 : i32
    return %arg0, %c0_i32, %arg1 : i32, i32, i32
  }
}

</mosaic_0001>

<llo_original>
// kernel: tpu_custom_call.1
$region0: #{tpu_custom_call.1}
  #allocation0 [shape = 'u32[]', space=smem, size = 0x4, offset = 0x4, fixed_abs, tag = 'smem constant byte address 0x4 - core index']
  #allocation1 [shape = 'u32[144,128]{1,0:T(1,128)}', space=vmem, size = 0x12000, scoped, tag = 'internal scratch']
  %s0 = inlined_call_operand.hbm [shape: f32[2,32,256], index: 0, kind: input, shape index: {}]
  %s1 = inlined_call_operand.hbm [shape: f32[2,32,256], index: 1, kind: input, shape index: {}]
  %s2 = inlined_call_operand.vmem [shape: f32[32,32], index: 2, kind: input, shape index: {}]
  %s3 = inlined_call_operand.vmem [shape: f32[32,1], index: 3, kind: input, shape index: {}]
  %s4 = inlined_call_operand.vmem [shape: f32[32,32], index: 4, kind: input, shape index: {}]
  %s5 = inlined_call_operand.vmem [shape: f32[32,1], index: 5, kind: input, shape index: {}]
  %s6 = inlined_call_operand.hbm [shape: f32[2,32,256], index: 6, kind: output, shape index: {}]
  %s7 = sld [smem:[#allocation0]]
  $region65: #{tpu_custom_call.1} parent=0
    _
  %s9 = ssub.s32 1, %s7
  %s10 = scalar_select 0, %s9, %s7
  $region1: #{tpu_custom_call.1} parent=0
    #allocation2 [shape = 'u8[65536]{0}', space=vmem, size = 0x10000, scoped, tag = 'input window, operand 0']
    #allocation3 [shape = 's32[2]{0}', space=sflag, size = 0x8, scoped, tag = 'scoped memory for tpu_custom_call.1']
    #allocation4 [shape = 's32[2]{0}', space=sflag, size = 0x8, scoped, tag = 'scoped memory for tpu_custom_call.1']
    #allocation5 [shape = 'u8[65536]{0}', space=vmem, size = 0x10000, scoped, tag = 'input window, operand 1']
    #allocation6 [shape = 's32[2]{0}', space=sflag, size = 0x8, scoped, tag = 'scoped memory for tpu_custom_call.1']
    #allocation7 [shape = 'u8[65536]{0}', space=vmem, size = 0x10000, scoped, tag = 'output window, operand 0']
    %11 = vsyncpa [#allocation3], 0
    %s12 = scalar_lea.sflag [#allocation3], 1
    %13 = vsyncpa %s12, 0
    %14 = vsyncpa [#allocation6], 0
    %s15 = scalar_lea.sflag [#allocation6], 1
    %16 = vsyncpa %s15, 0
    %17 = vsyncpa [#allocation4], 0
    %s18 = scalar_lea.sflag [#allocation4], 1
    %19 = vsyncpa %s18, 0
    loop: start=0, step=1, limit=4
    $region2: #{tpu_custom_call.1} parent=1 // loop_pre_header
      _
    $region3: #{tpu_custom_call.1} parent=1 // loop_header
      %s21 = sphi 0, %s25
      %p22 = scmp.ge.s32.totalorder %s21, 4
      %s28 = sphi 0, %s40
      %s29 = sphi 0, %s36
      %s30 = sphi 0, %s28
      %s31 = sphi 0, %s29
      %s32 = sphi 0, %s30
      %s33 = sphi 0, %s31
      %s45 = sphi 0, %s47
      %s48 = sphi 0, %s45
      %s49 = sphi 0, %s48
      %s65 = sphi 0, %s49
      %s73 = sphi 0, %s75
      %s76 = sphi 0, %s73
      %s77 = sphi 0, %s76
      %s93 = sphi 0, %s77
      %s97 = sphi 0, %s97
      %s99 = sphi 0, %s97
      %s100 = sphi 0, %s99
      %s114 = sphi 0, %s100
      %s118 = sphi 0, %s118
      %s120 = sphi 0, %s118
      %s121 = sphi 0, %s120
      %s135 = sphi 0, %s121
      %s139 = sphi 0, %s139
      %s141 = sphi 0, %s139
      %s142 = sphi 0, %s141
      %s156 = sphi 0, %s142
      %s160 = sphi 0, %s160
      %s162 = sphi 0, %s160
      %s163 = sphi 0, %s162
      %s177 = sphi 0, %s163
      %s185 = sphi 0, %s187
      %s188 = sphi 0, %s185
      %s189 = sphi 0, %s188
      %s205 = sphi 0, %s189
    $region4: #{tpu_custom_call.1} parent=1 // loop_header_branch
      %24 = sbr.rel (%p22) target = $region8
    $region5: #{tpu_custom_call.1} parent=1 // loop_body
      %s26 = ssub.s32 %s21, 1
      %s27 = ssub.s32 %s21, 2
      %s34 = sadd.s32 1, %s29
      %p35 = scmp.ge.s32.totalorder %s34, 1
      %s36 = scalar_select %p35, 0, %s34
      %s37 = sadd.s32 1, %s28
      %s38 = scalar_select %p35, %s37, %s28
      %p39 = scmp.ge.s32.totalorder %s38, 2
      %s40 = scalar_select %p39, 0, %s38
      %s41 = ssub.s32 %s28, %s40
      %s42 = ssub.s32 %s29, %s36
      %s43 = sor.u32 %s41, %s42
      %p44 = scmp.eq.s32.totalorder %s43, 0
      %s46 = sadd.s32 %s45, 1
      %s47 = scalar_select %p44, %s45, %s46
      %p50 = pneg %p44
      %p51 = scmp.eq.s32.totalorder %s21, 1
      %p52 = por %p50, %p51
      %p53 = scmp.ne.s32.totalorder %s45, %s48
      %p54 = scmp.eq.s32.totalorder %s21, 0
      %p55 = por %p53, %p54
      %p56 = scmp.ne.s32.totalorder %s45, %s48
      %p57 = scmp.eq.s32.totalorder %s26, 1
      %p58 = por %p56, %p57
      %p59 = scmp.ne.s32.totalorder %s48, %s49
      %p60 = scmp.eq.s32.totalorder %s26, 0
      %p61 = por %p59, %p60
      %p62 = scmp.ne.s32.totalorder %s48, %s49
      %p63 = scmp.eq.s32.totalorder %s27, 1
      %p64 = por %p62, %p63
      %p66 = scmp.ne.s32.totalorder %s49, %s65
      %p67 = scmp.eq.s32.totalorder %s27, 0
      %p68 = por %p66, %p67
      %s69 = ssub.s32 %s28, %s40
      %s70 = ssub.s32 %s29, %s36
      %s71 = sor.u32 %s69, %s70
      %p72 = scmp.eq.s32.totalorder %s71, 0
      %s74 = sadd.s32 %s73, 1
      %s75 = scalar_select %p72, %s73, %s74
      %p78 = pneg %p72
      %p79 = scmp.eq.s32.totalorder %s21, 1
      %p80 = por %p78, %p79
      %p81 = scmp.ne.s32.totalorder %s73, %s76
      %p82 = scmp.eq.s32.totalorder %s21, 0
      %p83 = por %p81, %p82
      %p84 = scmp.ne.s32.totalorder %s73, %s76
      %p85 = scmp.eq.s32.totalorder %s26, 1
      %p86 = por %p84, %p85
      %p87 = scmp.ne.s32.totalorder %s76, %s77
      %p88 = scmp.eq.s32.totalorder %s26, 0
      %p89 = por %p87, %p88
      %p90 = scmp.ne.s32.totalorder %s76, %s77
      %p91 = scmp.eq.s32.totalorder %s27, 1
      %p92 = por %p90, %p91
      %p94 = scmp.ne.s32.totalorder %s77, %s93
      %p95 = scmp.eq.s32.totalorder %s27, 0
      %p96 = por %p94, %p95
      %s98 = sadd.s32 %s97, 1
      %p101 = scmp.eq.s32.totalorder %s21, 1
      %p102 = scmp.ne.s32.totalorder %s97, %s99
      %p103 = scmp.eq.s32.totalorder %s21, 0
      %p104 = por %p102, %p103
      %p105 = scmp.ne.s32.totalorder %s97, %s99
      %p106 = scmp.eq.s32.totalorder %s26, 1
      %p107 = por %p105, %p106
      %p108 = scmp.ne.s32.totalorder %s99, %s100
      %p109 = scmp.eq.s32.totalorder %s26, 0
      %p110 = por %p108, %p109
      %p111 = scmp.ne.s32.totalorder %s99, %s100
      %p112 = scmp.eq.s32.totalorder %s27, 1
      %p113 = por %p111, %p112
      %p115 = scmp.ne.s32.totalorder %s100, %s114
      %p116 = scmp.eq.s32.totalorder %s27, 0
      %p117 = por %p115, %p116
      %s119 = sadd.s32 %s118, 1
      %p122 = scmp.eq.s32.totalorder %s21, 1
      %p123 = scmp.ne.s32.totalorder %s118, %s120
      %p124 = scmp.eq.s32.totalorder %s21, 0
      %p125 = por %p123, %p124
      %p126 = scmp.ne.s32.totalorder %s118, %s120
      %p127 = scmp.eq.s32.totalorder %s26, 1
      %p128 = por %p126, %p127
      %p129 = scmp.ne.s32.totalorder %s120, %s121
      %p130 = scmp.eq.s32.totalorder %s26, 0
      %p131 = por %p129, %p130
      %p132 = scmp.ne.s32.totalorder %s120, %s121
      %p133 = scmp.eq.s32.totalorder %s27, 1
      %p134 = por %p132, %p133
      %p136 = scmp.ne.s32.totalorder %s121, %s135
      %p137 = scmp.eq.s32.totalorder %s27, 0
      %p138 = por %p136, %p137
      %s140 = sadd.s32 %s139, 1
      %p143 = scmp.eq.s32.totalorder %s21, 1
      %p144 = scmp.ne.s32.totalorder %s139, %s141
      %p145 = scmp.eq.s32.totalorder %s21, 0
      %p146 = por %p144, %p145
      %p147 = scmp.ne.s32.totalorder %s139, %s141
      %p148 = scmp.eq.s32.totalorder %s26, 1
      %p149 = por %p147, %p148
      %p150 = scmp.ne.s32.totalorder %s141, %s142
      %p151 = scmp.eq.s32.totalorder %s26, 0
      %p152 = por %p150, %p151
      %p153 = scmp.ne.s32.totalorder %s141, %s142
      %p154 = scmp.eq.s32.totalorder %s27, 1
      %p155 = por %p153, %p154
      %p157 = scmp.ne.s32.totalorder %s142, %s156
      %p158 = scmp.eq.s32.totalorder %s27, 0
      %p159 = por %p157, %p158
      %s161 = sadd.s32 %s160, 1
      %p164 = scmp.eq.s32.totalorder %s21, 1
      %p165 = scmp.ne.s32.totalorder %s160, %s162
      %p166 = scmp.eq.s32.totalorder %s21, 0
      %p167 = por %p165, %p166
      %p168 = scmp.ne.s32.totalorder %s160, %s162
      %p169 = scmp.eq.s32.totalorder %s26, 1
      %p170 = por %p168, %p169
      %p171 = scmp.ne.s32.totalorder %s162, %s163
      %p172 = scmp.eq.s32.totalorder %s26, 0
      %p173 = por %p171, %p172
      %p174 = scmp.ne.s32.totalorder %s162, %s163
      %p175 = scmp.eq.s32.totalorder %s27, 1
      %p176 = por %p174, %p175
      %p178 = scmp.ne.s32.totalorder %s163, %s177
      %p179 = scmp.eq.s32.totalorder %s27, 0
      %p180 = por %p178, %p179
      %s181 = ssub.s32 %s28, %s40
      %s182 = ssub.s32 %s29, %s36
      %s183 = sor.u32 %s181, %s182
      %p184 = scmp.eq.s32.totalorder %s183, 0
      %s186 = sadd.s32 %s185, 1
      %s187 = scalar_select %p184, %s185, %s186
      %p190 = pneg %p184
      %p191 = scmp.eq.s32.totalorder %s21, 1
      %p192 = por %p190, %p191
      %p193 = scmp.ne.s32.totalorder %s185, %s188
      %p194 = scmp.eq.s32.totalorder %s21, 0
      %p195 = por %p193, %p194
      %p196 = scmp.ne.s32.totalorder %s185, %s188
      %p197 = scmp.eq.s32.totalorder %s26, 1
      %p198 = por %p196, %p197
      %p199 = scmp.ne.s32.totalorder %s188, %s189
      %p200 = scmp.eq.s32.totalorder %s26, 0
      %p201 = por %p199, %p200
      %p202 = scmp.ne.s32.totalorder %s188, %s189
      %p203 = scmp.eq.s32.totalorder %s27, 1
      %p204 = por %p202, %p203
      %p206 = scmp.ne.s32.totalorder %s189, %s205
      %p207 = scmp.eq.s32.totalorder %s27, 0
      %p208 = por %p206, %p207
      %p209 = scmp.le.s32.totalorder 1, %s21
      %p210 = scmp.lt.s32.totalorder %s21, 3
      %p211 = pnand %p209, %p210
      %p212 = pneg %p211
      // Predicated region
      $region9: #{tpu_custom_call.1} parent=5 // pred_check
        _
      $region10: #{tpu_custom_call.1} parent=5 // pred_check_branch
        %214 = sbr.rel (%p211) target = $region12
      $region11: #{tpu_custom_call.1} parent=5 // pred_region
        %s215 = ssub.s32 %s21, 1
        // Predicated region
        $region13: #{tpu_custom_call.1} parent=11 // pred_check
          %p216 = pneg %p110
        $region14: #{tpu_custom_call.1} parent=11 // pred_check_branch
          %218 = sbr.rel (%p216) target = $region16
        $region15: #{tpu_custom_call.1} parent=11 // pred_region
          _
        $region16: #{tpu_custom_call.1} parent=11 // pred_fallthru
          _
        // Predicated region
        $region17: #{tpu_custom_call.1} parent=11 // pred_check
          %p219 = pneg %p131
        $region18: #{tpu_custom_call.1} parent=11 // pred_check_branch
          %221 = sbr.rel (%p219) target = $region20
        $region19: #{tpu_custom_call.1} parent=11 // pred_region
          _
        $region20: #{tpu_custom_call.1} parent=11 // pred_fallthru
          _
        // Predicated region
        $region21: #{tpu_custom_call.1} parent=11 // pred_check
          %p222 = pneg %p152
        $region22: #{tpu_custom_call.1} parent=11 // pred_check_branch
          %224 = sbr.rel (%p222) target = $region24
        $region23: #{tpu_custom_call.1} parent=11 // pred_region
          _
        $region24: #{tpu_custom_call.1} parent=11 // pred_fallthru
          _
        // Predicated region
        $region25: #{tpu_custom_call.1} parent=11 // pred_check
          %p225 = pneg %p173
        $region26: #{tpu_custom_call.1} parent=11 // pred_check_branch
          %227 = sbr.rel (%p225) target = $region28
        $region27: #{tpu_custom_call.1} parent=11 // pred_region
          _
        $region28: #{tpu_custom_call.1} parent=11 // pred_fallthru
          _
      $region12: #{tpu_custom_call.1} parent=5 // pred_fallthru
        _
      %p228 = scmp.lt.s32.totalorder %s21, 2
      // Predicated region
      $region29: #{tpu_custom_call.1} parent=5 // pred_check
        %p229 = pneg %p228
      $region30: #{tpu_custom_call.1} parent=5 // pred_check_branch
        %231 = sbr.rel (%p229) target = $region32
      $region31: #{tpu_custom_call.1} parent=5 // pred_region
        // Predicated region
        $region33: #{tpu_custom_call.1} parent=31 // pred_check
          %p232 = pneg %p55
        $region34: #{tpu_custom_call.1} parent=31 // pred_check_branch
          %234 = sbr.rel (%p232) target = $region36
        $region35: #{tpu_custom_call.1} parent=31 // pred_region
          %s235 = sand.u32 %s45, 1
          %s236 = scalar_lea.sflag [#allocation3], %s235
          %s237 = sand.u32 %s45, 1
          %s238 = smul.addr %s237, 64
          %s239 = scalar_lea.vmem [#allocation2], %s238
          %s240 = smul.u32 2, %s29
          %s242 = ssub.s32 1024, 1024
          %243 = vsyncadd %s236, %s242
          %s244 = smul.addr %s28, 8
          %s245 = sadd.s32 %s240, %s244
          %s246 = smul.addr %s245, 128
          %s247 = scalar_lea.hbm %s0, %s246
          %s248 = sshll.u32 %s239, 4
          %s249 = int_to_ptr.vmem [resolvable:$true] %s248
          %254 = dma.hbm_to_vmem [thread:$0]  %s247, 1024, %s249, %s236, 256, 256, 16
        $region36: #{tpu_custom_call.1} parent=31 // pred_fallthru
          _
        // Predicated region
        $region37: #{tpu_custom_call.1} parent=31 // pred_check
          %p255 = pneg %p83
        $region38: #{tpu_custom_call.1} parent=31 // pred_check_branch
          %257 = sbr.rel (%p255) target = $region40
        $region39: #{tpu_custom_call.1} parent=31 // pred_region
          %s258 = sand.u32 %s73, 1
          %s259 = scalar_lea.sflag [#allocation6], %s258
          %s260 = sand.u32 %s73, 1
          %s261 = smul.addr %s260, 64
          %s262 = scalar_lea.vmem [#allocation5], %s261
          %s263 = smul.u32 2, %s29
          %s265 = ssub.s32 1024, 1024
          %266 = vsyncadd %s259, %s265
          %s267 = smul.addr %s28, 8
          %s268 = sadd.s32 %s263, %s267
          %s269 = smul.addr %s268, 128
          %s270 = scalar_lea.hbm %s1, %s269
          %s271 = sshll.u32 %s262, 4
          %s272 = int_to_ptr.vmem [resolvable:$true] %s271
          %277 = dma.hbm_to_vmem [thread:$0]  %s270, 1024, %s272, %s259, 256, 256, 16
        $region40: #{tpu_custom_call.1} parent=31 // pred_fallthru
          _
      $region32: #{tpu_custom_call.1} parent=5 // pred_fallthru
        _
      %p278 = scmp.le.s32.totalorder 1, %s21
      %p279 = scmp.lt.s32.totalorder %s21, 3
      %p280 = pnand %p278, %p279
      %p281 = pneg %p280
      // Predicated region
      $region41: #{tpu_custom_call.1} parent=5 // pred_check
        _
      $region42: #{tpu_custom_call.1} parent=5 // pred_check_branch
        %283 = sbr.rel (%p280) target = $region44
      $region43: #{tpu_custom_call.1} parent=5 // pred_region
        %s284 = ssub.s32 %s21, 1
        %s285 = sand.u32 %s48, 1
        %s286 = scalar_lea.sflag [#allocation3], %s285
        %s287 = sand.u32 %s48, 1
        %s288 = smul.addr %s287, 64
        %s289 = scalar_lea.vmem [#allocation2], %s288
        // Predicated region
        $region45: #{tpu_custom_call.1} parent=43 // pred_check
          %p290 = pneg %p61
        $region46: #{tpu_custom_call.1} parent=43 // pred_check_branch
          %292 = sbr.rel (%p290) target = $region48
        $region47: #{tpu_custom_call.1} parent=43 // pred_region
          %293 = dma.done %s286, 1024
        $region48: #{tpu_custom_call.1} parent=43 // pred_fallthru
          _
        %s294 = sand.u32 %s76, 1
        %s295 = scalar_lea.sflag [#allocation6], %s294
        %s296 = sand.u32 %s76, 1
        %s297 = smul.addr %s296, 64
        %s298 = scalar_lea.vmem [#allocation5], %s297
        // Predicated region
        $region49: #{tpu_custom_call.1} parent=43 // pred_check
          %p299 = pneg %p89
        $region50: #{tpu_custom_call.1} parent=43 // pred_check_branch
          %301 = sbr.rel (%p299) target = $region52
        $region51: #{tpu_custom_call.1} parent=43 // pred_region
          %302 = dma.done %s295, 1024
        $region52: #{tpu_custom_call.1} parent=43 // pred_fallthru
          _
        %s303 = sand.u32 %s48, 1
        %s304 = scalar_lea.sflag [#allocation3], %s303
        %s305 = sand.u32 %s48, 1
        %s306 = smul.addr %s305, 64
        %s307 = scalar_lea.vmem [#allocation2], %s306
        %p308 = pneg %p61
        %p309 = pneg %p58
        %s310 = sand.u32 %s76, 1
        %s311 = scalar_lea.sflag [#allocation6], %s310
        %s312 = sand.u32 %s76, 1
        %s313 = smul.addr %s312, 64
        %s314 = scalar_lea.vmem [#allocation5], %s313
        %p315 = pneg %p89
        %p316 = pneg %p86
        %p317 = pneg %p110
        %p318 = pneg %p107
        %p319 = pneg %p131
        %p320 = pneg %p128
        %p321 = pneg %p152
        %p322 = pneg %p149
        %p323 = pneg %p173
        %p324 = pneg %p170
        %p325 = pneg %p201
        %p326 = pneg %p198
        %s327 = sand.u32 %s188, 1
        %s328 = scalar_lea.sflag [#allocation4], %s327
        %s329 = sand.u32 %s188, 1
        %s330 = smul.addr %s329, 64
        %s331 = scalar_lea.vmem [#allocation7], %s330
        %s332 = smul.u32 2, %s31
        %s333 = smul.u32 2, %s31
        %s334 = smul.u32 2, %s31
        %v335 = vld [vmem:[%s289] sm:$0xff]
        %v336 = vld [vmem:[%s289 + $0x8] sm:$0xff]
        %v337 = vld [vmem:[%s289 + $0x10] sm:$0xff]
        %v338 = vld [vmem:[%s289 + $0x18] sm:$0xff]
        %v339 = vld [vmem:[%s289 + $0x20] sm:$0xff]
        %v340 = vld [vmem:[%s289 + $0x28] sm:$0xff]
        %v341 = vld [vmem:[%s289 + $0x30] sm:$0xff]
        %v342 = vld [vmem:[%s289 + $0x38] sm:$0xff]
        %v343 = vld [vmem:[%s298] sm:$0xff]
        %v344 = vld [vmem:[%s298 + $0x8] sm:$0xff]
        %v345 = vld [vmem:[%s298 + $0x10] sm:$0xff]
        %v346 = vld [vmem:[%s298 + $0x18] sm:$0xff]
        %v347 = vld [vmem:[%s298 + $0x20] sm:$0xff]
        %v348 = vld [vmem:[%s298 + $0x28] sm:$0xff]
        %v349 = vld [vmem:[%s298 + $0x30] sm:$0xff]
        %v350 = vld [vmem:[%s298 + $0x38] sm:$0xff]
        %v351 = vld [vmem:[%s2] sm:$0xff]
        %v352 = vld [vmem:[%s2 + $0x8] sm:$0xff]
        %v353 = vld [vmem:[%s2 + $0x10] sm:$0xff]
        %v354 = vld [vmem:[%s2 + $0x18] sm:$0xff]
        %v355 = vld [vmem:[%s4] sm:$0xff]
        %v356 = vld [vmem:[%s4 + $0x8] sm:$0xff]
        %v357 = vld [vmem:[%s4 + $0x10] sm:$0xff]
        %v358 = vld [vmem:[%s4 + $0x18] sm:$0xff]
        %v359 = vld [vmem:[%s3] sm:$0xff]
        %v360 = vld [vmem:[%s3 + $0x8] sm:$0xff]
        %v361 = vld [vmem:[%s3 + $0x10] sm:$0xff]
        %v362 = vld [vmem:[%s3 + $0x18] sm:$0xff]
        %v363 = vld [vmem:[%s5] sm:$0xff]
        %v364 = vld [vmem:[%s5 + $0x8] sm:$0xff]
        %v365 = vld [vmem:[%s5 + $0x10] sm:$0xff]
        %v366 = vld [vmem:[%s5 + $0x18] sm:$0xff]
        %368 = vset.pattern.permute.xlu0 0
        %369 = vperm.xlu0 %368, %v359
        %v370 = vpop.permute.xlu0 %369
        %373 = vset.pattern.permute.xlu0 0
        %374 = vperm.xlu0 %373, %v360
        %v375 = vpop.permute.xlu0 %374
        %378 = vset.pattern.permute.xlu0 0
        %379 = vperm.xlu0 %378, %v361
        %v380 = vpop.permute.xlu0 %379
        %383 = vset.pattern.permute.xlu0 0
        %384 = vperm.xlu0 %383, %v362
        %v385 = vpop.permute.xlu0 %384
        %vm387 = vcmask 261120
        %v389 = vsel %vm387, %v351, 0
        %v392 = vsel %vm387, %v352, 0
        %v395 = vsel %vm387, %v353, 0
        %v398 = vsel %vm387, %v354, 0
        %400 = vmatprep.subr.mxu0 %v336
        %401 = vmatpush1.msra.mxu0 %v335
        %402 = vmatprep.subr.mxu0 %v338
        %403 = vmatpush1.msra.mxu0 %v337
        %404 = vmatprep.subr.mxu0 %v340
        %405 = vmatpush1.msra.mxu0 %v339
        %406 = vmatprep.subr.mxu0 %v342
        %407 = vmatpush1.msra.mxu0 %v341
        %408 = vmatprep.subr.mxu0 0.0
        %409 = vmatpush1.msra.mxu0 0.0
        %410 = vmatprep.subr.mxu0 0.0
        %411 = vmatpush1.msra.mxu0 0.0
        %412 = vmatprep.subr.mxu0 0.0
        %413 = vmatpush1.msra.mxu0 0.0
        %414 = vmatprep.subr.mxu0 0.0
        %415 = vmatpush1.msra.mxu0 0.0
        %416 = vmatprep.subr.mxu0 0.0
        %417 = vmatpush1.msra.mxu0 0.0
        %418 = vmatprep.subr.mxu0 0.0
        %419 = vmatpush1.msra.mxu0 0.0
        %420 = vmatprep.subr.mxu0 0.0
        %421 = vmatpush1.msra.mxu0 0.0
        %422 = vmatprep.subr.mxu0 0.0
        %423 = vmatpush1.msra.mxu0 0.0
        %424 = vmatprep.subr.mxu0 0.0
        %425 = vmatpush1.msra.mxu0 0.0
        %426 = vmatprep.subr.mxu0 0.0
        %427 = vmatpush1.msra.mxu0 0.0
        %428 = vmatprep.subr.mxu0 0.0
        %429 = vmatpush1.msra.mxu0 0.0
        %430 = vmatprep.subr.mxu0 0.0
        %431 = vmatpush1.msra.mxu0 0.0
        %432 = vmatprep.subr.mxu0 0.0
        %433 = vmatpush1.msra.mxu0 0.0
        %434 = vmatprep.subr.mxu0 0.0
        %435 = vmatpush1.msra.mxu0 0.0
        %436 = vmatprep.subr.mxu0 0.0
        %437 = vmatpush1.msra.mxu0 0.0
        %438 = vmatprep.subr.mxu0 0.0
        %439 = vmatpush1.msra.mxu0 0.0
        %440 = vmatprep.subr.mxu0 0.0
        %441 = vmatpush1.msra.mxu0 0.0
        %442 = vmatprep.subr.mxu0 0.0
        %443 = vmatpush1.msra.mxu0 0.0
        %444 = vmatprep.subr.mxu0 0.0
        %445 = vmatpush1.msra.mxu0 0.0
        %446 = vmatprep.subr.mxu0 0.0
        %447 = vmatpush1.msra.mxu0 0.0
        %448 = vmatprep.subr.mxu0 0.0
        %449 = vmatpush1.msra.mxu0 0.0
        %450 = vmatprep.subr.mxu0 0.0
        %451 = vmatpush1.msra.mxu0 0.0
        %452 = vmatprep.subr.mxu0 0.0
        %453 = vmatpush1.msra.mxu0 0.0
        %454 = vmatprep.subr.mxu0 0.0
        %455 = vmatpush1.msra.mxu0 0.0
        %456 = vmatprep.subr.mxu0 0.0
        %457 = vmatpush1.msra.mxu0 0.0
        %458 = vmatprep.subr.mxu0 0.0
        %459 = vmatpush1.msra.mxu0 0.0
        %460 = vmatprep.subr.mxu0 0.0
        %461 = vmatpush1.msra.mxu0 0.0
        %462 = vmatprep.subr.mxu0 0.0
        %463 = vmatpush1.msra.mxu0 0.0
        %464 = vmatprep.mubr.f32.mxu0 0.0
        %465 = vmatmul.mubr.f32.gmra.mrb[0].mxu0 %v389
        %v466 = vpop.f32.mrb[0].mxu0
        %v467 = vadd.f32 %v370, %v466
        %v468 = vpop.f32.mrb[0].mxu0
        %v469 = vadd.f32 %v370, %v468
        %470 = vmatprep.mubr.f32.mxu0 0.0
        %471 = vmatmul.mubr.f32.gmra.mrb[0].mxu0 %v392
        %v472 = vpop.f32.mrb[0].mxu0
        %v473 = vadd.f32 %v375, %v472
        %v474 = vpop.f32.mrb[0].mxu0
        %v475 = vadd.f32 %v375, %v474
        %476 = vmatprep.mubr.f32.mxu0 0.0
        %477 = vmatmul.mubr.f32.gmra.mrb[0].mxu0 %v395
        %v478 = vpop.f32.mrb[0].mxu0
        %v479 = vadd.f32 %v380, %v478
        %v480 = vpop.f32.mrb[0].mxu0
        %v481 = vadd.f32 %v380, %v480
        %482 = vmatprep.mubr.f32.mxu0 0.0
        %483 = vmatmul.mubr.f32.gmra.mrb[0].mxu0 %v398
        %v484 = vpop.f32.mrb[0].mxu0
        %v485 = vadd.f32 %v385, %v484
        %v486 = vpop.f32.mrb[0].mxu0
        %v487 = vadd.f32 %v385, %v486
        %488 = vdwg.mxu0
        %v489 = vmax.f32 %v467, 0.0
        %v490 = vmax.f32 %v469, 0.0
        %v491 = vmax.f32 %v473, 0.0
        %v492 = vmax.f32 %v475, 0.0
        %v493 = vmax.f32 %v479, 0.0
        %v494 = vmax.f32 %v481, 0.0
        %v495 = vmax.f32 %v485, 0.0
        %v496 = vmax.f32 %v487, 0.0
        %498 = vset.pattern.permute.xlu0 0
        %499 = vperm.xlu0 %498, %v363
        %v500 = vpop.permute.xlu0 %499
        %503 = vset.pattern.permute.xlu0 0
        %504 = vperm.xlu0 %503, %v364
        %v505 = vpop.permute.xlu0 %504
        %508 = vset.pattern.permute.xlu0 0
        %509 = vperm.xlu0 %508, %v365
        %v510 = vpop.permute.xlu0 %509
        %513 = vset.pattern.permute.xlu0 0
        %514 = vperm.xlu0 %513, %v366
        %v515 = vpop.permute.xlu0 %514
        %v518 = vsel %vm387, %v355, 0
        %v521 = vsel %vm387, %v356, 0
        %v524 = vsel %vm387, %v357, 0
        %v527 = vsel %vm387, %v358, 0
        %529 = vmatprep.subr.mxu0 %v490
        %530 = vmatpush1.msra.mxu0 %v489
        %531 = vmatprep.subr.mxu0 %v492
        %532 = vmatpush1.msra.mxu0 %v491
        %533 = vmatprep.subr.mxu0 %v494
        %534 = vmatpush1.msra.mxu0 %v493
        %535 = vmatprep.subr.mxu0 %v496
        %536 = vmatpush1.msra.mxu0 %v495
        %537 = vmatprep.subr.mxu0 0.0
        %538 = vmatpush1.msra.mxu0 0.0
        %539 = vmatprep.subr.mxu0 0.0
        %540 = vmatpush1.msra.mxu0 0.0
        %541 = vmatprep.subr.mxu0 0.0
        %542 = vmatpush1.msra.mxu0 0.0
        %543 = vmatprep.subr.mxu0 0.0
        %544 = vmatpush1.msra.mxu0 0.0
        %545 = vmatprep.subr.mxu0 0.0
        %546 = vmatpush1.msra.mxu0 0.0
        %547 = vmatprep.subr.mxu0 0.0
        %548 = vmatpush1.msra.mxu0 0.0
        %549 = vmatprep.subr.mxu0 0.0
        %550 = vmatpush1.msra.mxu0 0.0
        %551 = vmatprep.subr.mxu0 0.0
        %552 = vmatpush1.msra.mxu0 0.0
        %553 = vmatprep.subr.mxu0 0.0
        %554 = vmatpush1.msra.mxu0 0.0
        %555 = vmatprep.subr.mxu0 0.0
        %556 = vmatpush1.msra.mxu0 0.0
        %557 = vmatprep.subr.mxu0 0.0
        %558 = vmatpush1.msra.mxu0 0.0
        %559 = vmatprep.subr.mxu0 0.0
        %560 = vmatpush1.msra.mxu0 0.0
        %561 = vmatprep.subr.mxu0 0.0
        %562 = vmatpush1.msra.mxu0 0.0
        %563 = vmatprep.subr.mxu0 0.0
        %564 = vmatpush1.msra.mxu0 0.0
        %565 = vmatprep.subr.mxu0 0.0
        %566 = vmatpush1.msra.mxu0 0.0
        %567 = vmatprep.subr.mxu0 0.0
        %568 = vmatpush1.msra.mxu0 0.0
        %569 = vmatprep.subr.mxu0 0.0
        %570 = vmatpush1.msra.mxu0 0.0
        %571 = vmatprep.subr.mxu0 0.0
        %572 = vmatpush1.msra.mxu0 0.0
        %573 = vmatprep.subr.mxu0 0.0
        %574 = vmatpush1.msra.mxu0 0.0
        %575 = vmatprep.subr.mxu0 0.0
        %576 = vmatpush1.msra.mxu0 0.0
        %577 = vmatprep.subr.mxu0 0.0
        %578 = vmatpush1.msra.mxu0 0.0
        %579 = vmatprep.subr.mxu0 0.0
        %580 = vmatpush1.msra.mxu0 0.0
        %581 = vmatprep.subr.mxu0 0.0
        %582 = vmatpush1.msra.mxu0 0.0
        %583 = vmatprep.subr.mxu0 0.0
        %584 = vmatpush1.msra.mxu0 0.0
        %585 = vmatprep.subr.mxu0 0.0
        %586 = vmatpush1.msra.mxu0 0.0
        %587 = vmatprep.subr.mxu0 0.0
        %588 = vmatpush1.msra.mxu0 0.0
        %589 = vmatprep.subr.mxu0 0.0
        %590 = vmatpush1.msra.mxu0 0.0
        %591 = vmatprep.subr.mxu0 0.0
        %592 = vmatpush1.msra.mxu0 0.0
        %593 = vmatprep.mubr.f32.mxu0 0.0
        %594 = vmatmul.mubr.f32.gmra.mrb[0].mxu0 %v518
        %v595 = vpop.f32.mrb[0].mxu0
        %v596 = vadd.f32 %v500, %v595
        %v597 = vpop.f32.mrb[0].mxu0
        %v598 = vadd.f32 %v500, %v597
        %599 = vmatprep.mubr.f32.mxu0 0.0
        %600 = vmatmul.mubr.f32.gmra.mrb[0].mxu0 %v521
        %v601 = vpop.f32.mrb[0].mxu0
        %v602 = vadd.f32 %v505, %v601
        %v603 = vpop.f32.mrb[0].mxu0
        %v604 = vadd.f32 %v505, %v603
        %605 = vmatprep.mubr.f32.mxu0 0.0
        %606 = vmatmul.mubr.f32.gmra.mrb[0].mxu0 %v524
        %v607 = vpop.f32.mrb[0].mxu0
        %v608 = vadd.f32 %v510, %v607
        %v609 = vpop.f32.mrb[0].mxu0
        %v610 = vadd.f32 %v510, %v609
        %611 = vmatprep.mubr.f32.mxu0 0.0
        %612 = vmatmul.mubr.f32.gmra.mrb[0].mxu0 %v527
        %v613 = vpop.f32.mrb[0].mxu0
        %v614 = vadd.f32 %v515, %v613
        %v615 = vpop.f32.mrb[0].mxu0
        %v616 = vadd.f32 %v515, %v615
        %617 = vdwg.mxu0
        %v618 = vmax.f32 %v596, 0.0
        %v619 = vmax.f32 %v598, 0.0
        %v620 = vmax.f32 %v602, 0.0
        %v621 = vmax.f32 %v604, 0.0
        %v622 = vmax.f32 %v608, 0.0
        %v623 = vmax.f32 %v610, 0.0
        %v624 = vmax.f32 %v614, 0.0
        %v625 = vmax.f32 %v616, 0.0
        %v626 = vmul.f32 %v335, %v618
        %v627 = vmul.f32 %v336, %v619
        %v628 = vmul.f32 %v337, %v620
        %v629 = vmul.f32 %v338, %v621
        %v630 = vmul.f32 %v339, %v622
        %v631 = vmul.f32 %v340, %v623
        %v632 = vmul.f32 %v341, %v624
        %v633 = vmul.f32 %v342, %v625
        %634 = vmatprep.subr.mxu0 %v344
        %635 = vmatpush1.msra.mxu0 %v343
        %636 = vmatprep.subr.mxu0 %v346
        %637 = vmatpush1.msra.mxu0 %v345
        %638 = vmatprep.subr.mxu0 %v348
        %639 = vmatpush1.msra.mxu0 %v347
        %640 = vmatprep.subr.mxu0 %v350
        %641 = vmatpush1.msra.mxu0 %v349
        %642 = vmatprep.subr.mxu0 0.0
        %643 = vmatpush1.msra.mxu0 0.0
        %644 = vmatprep.subr.mxu0 0.0
        %645 = vmatpush1.msra.mxu0 0.0
        %646 = vmatprep.subr.mxu0 0.0
        %647 = vmatpush1.msra.mxu0 0.0
        %648 = vmatprep.subr.mxu0 0.0
        %649 = vmatpush1.msra.mxu0 0.0
        %650 = vmatprep.subr.mxu0 0.0
        %651 = vmatpush1.msra.mxu0 0.0
        %652 = vmatprep.subr.mxu0 0.0
        %653 = vmatpush1.msra.mxu0 0.0
        %654 = vmatprep.subr.mxu0 0.0
        %655 = vmatpush1.msra.mxu0 0.0
        %656 = vmatprep.subr.mxu0 0.0
        %657 = vmatpush1.msra.mxu0 0.0
        %658 = vmatprep.subr.mxu0 0.0
        %659 = vmatpush1.msra.mxu0 0.0
        %660 = vmatprep.subr.mxu0 0.0
        %661 = vmatpush1.msra.mxu0 0.0
        %662 = vmatprep.subr.mxu0 0.0
        %663 = vmatpush1.msra.mxu0 0.0
        %664 = vmatprep.subr.mxu0 0.0
        %665 = vmatpush1.msra.mxu0 0.0
        %666 = vmatprep.subr.mxu0 0.0
        %667 = vmatpush1.msra.mxu0 0.0
        %668 = vmatprep.subr.mxu0 0.0
        %669 = vmatpush1.msra.mxu0 0.0
        %670 = vmatprep.subr.mxu0 0.0
        %671 = vmatpush1.msra.mxu0 0.0
        %672 = vmatprep.subr.mxu0 0.0
        %673 = vmatpush1.msra.mxu0 0.0
        %674 = vmatprep.subr.mxu0 0.0
        %675 = vmatpush1.msra.mxu0 0.0
        %676 = vmatprep.subr.mxu0 0.0
        %677 = vmatpush1.msra.mxu0 0.0
        %678 = vmatprep.subr.mxu0 0.0
        %679 = vmatpush1.msra.mxu0 0.0
        %680 = vmatprep.subr.mxu0 0.0
        %681 = vmatpush1.msra.mxu0 0.0
        %682 = vmatprep.subr.mxu0 0.0
        %683 = vmatpush1.msra.mxu0 0.0
        %684 = vmatprep.subr.mxu0 0.0
        %685 = vmatpush1.msra.mxu0 0.0
        %686 = vmatprep.subr.mxu0 0.0
        %687 = vmatpush1.msra.mxu0 0.0
        %688 = vmatprep.subr.mxu0 0.0
        %689 = vmatpush1.msra.mxu0 0.0
        %690 = vmatprep.subr.mxu0 0.0
        %691 = vmatpush1.msra.mxu0 0.0
        %692 = vmatprep.subr.mxu0 0.0
        %693 = vmatpush1.msra.mxu0 0.0
        %694 = vmatprep.subr.mxu0 0.0
        %695 = vmatpush1.msra.mxu0 0.0
        %696 = vmatprep.subr.mxu0 0.0
        %697 = vmatpush1.msra.mxu0 0.0
        %698 = vmatprep.mubr.f32.mxu0 0.0
        %699 = vmatmul.mubr.f32.gmra.mrb[0].mxu0 %v389
        %v700 = vpop.f32.mrb[0].mxu0
        %v701 = vadd.f32 %v370, %v700
        %v702 = vpop.f32.mrb[0].mxu0
        %v703 = vadd.f32 %v370, %v702
        %704 = vmatprep.mubr.f32.mxu0 0.0
        %705 = vmatmul.mubr.f32.gmra.mrb[0].mxu0 %v392
        %v706 = vpop.f32.mrb[0].mxu0
        %v707 = vadd.f32 %v375, %v706
        %v708 = vpop.f32.mrb[0].mxu0
        %v709 = vadd.f32 %v375, %v708
        %710 = vmatprep.mubr.f32.mxu0 0.0
        %711 = vmatmul.mubr.f32.gmra.mrb[0].mxu0 %v395
        %v712 = vpop.f32.mrb[0].mxu0
        %v713 = vadd.f32 %v380, %v712
        %v714 = vpop.f32.mrb[0].mxu0
        %v715 = vadd.f32 %v380, %v714
        %716 = vmatprep.mubr.f32.mxu0 0.0
        %717 = vmatmul.mubr.f32.gmra.mrb[0].mxu0 %v398
        %v718 = vpop.f32.mrb[0].mxu0
        %v719 = vadd.f32 %v385, %v718
        %v720 = vpop.f32.mrb[0].mxu0
        %v721 = vadd.f32 %v385, %v720
        %722 = vdwg.mxu0
        %v723 = vmax.f32 %v701, 0.0
        %v724 = vmax.f32 %v703, 0.0
        %v725 = vmax.f32 %v707, 0.0
        %v726 = vmax.f32 %v709, 0.0
        %v727 = vmax.f32 %v713, 0.0
        %v728 = vmax.f32 %v715, 0.0
        %v729 = vmax.f32 %v719, 0.0
        %v730 = vmax.f32 %v721, 0.0
        %731 = vmatprep.subr.mxu0 %v724
        %732 = vmatpush1.msra.mxu0 %v723
        %733 = vmatprep.subr.mxu0 %v726
        %734 = vmatpush1.msra.mxu0 %v725
        %735 = vmatprep.subr.mxu0 %v728
        %736 = vmatpush1.msra.mxu0 %v727
        %737 = vmatprep.subr.mxu0 %v730
        %738 = vmatpush1.msra.mxu0 %v729
        %739 = vmatprep.subr.mxu0 0.0
        %740 = vmatpush1.msra.mxu0 0.0
        %741 = vmatprep.subr.mxu0 0.0
        %742 = vmatpush1.msra.mxu0 0.0
        %743 = vmatprep.subr.mxu0 0.0
        %744 = vmatpush1.msra.mxu0 0.0
        %745 = vmatprep.subr.mxu0 0.0
        %746 = vmatpush1.msra.mxu0 0.0
        %747 = vmatprep.subr.mxu0 0.0
        %748 = vmatpush1.msra.mxu0 0.0
        %749 = vmatprep.subr.mxu0 0.0
        %750 = vmatpush1.msra.mxu0 0.0
        %751 = vmatprep.subr.mxu0 0.0
        %752 = vmatpush1.msra.mxu0 0.0
        %753 = vmatprep.subr.mxu0 0.0
        %754 = vmatpush1.msra.mxu0 0.0
        %755 = vmatprep.subr.mxu0 0.0
        %756 = vmatpush1.msra.mxu0 0.0
        %757 = vmatprep.subr.mxu0 0.0
        %758 = vmatpush1.msra.mxu0 0.0
        %759 = vmatprep.subr.mxu0 0.0
        %760 = vmatpush1.msra.mxu0 0.0
        %761 = vmatprep.subr.mxu0 0.0
        %762 = vmatpush1.msra.mxu0 0.0
        %763 = vmatprep.subr.mxu0 0.0
        %764 = vmatpush1.msra.mxu0 0.0
        %765 = vmatprep.subr.mxu0 0.0
        %766 = vmatpush1.msra.mxu0 0.0
        %767 = vmatprep.subr.mxu0 0.0
        %768 = vmatpush1.msra.mxu0 0.0
        %769 = vmatprep.subr.mxu0 0.0
        %770 = vmatpush1.msra.mxu0 0.0
        %771 = vmatprep.subr.mxu0 0.0
        %772 = vmatpush1.msra.mxu0 0.0
        %773 = vmatprep.subr.mxu0 0.0
        %774 = vmatpush1.msra.mxu0 0.0
        %775 = vmatprep.subr.mxu0 0.0
        %776 = vmatpush1.msra.mxu0 0.0
        %777 = vmatprep.subr.mxu0 0.0
        %778 = vmatpush1.msra.mxu0 0.0
        %779 = vmatprep.subr.mxu0 0.0
        %780 = vmatpush1.msra.mxu0 0.0
        %781 = vmatprep.subr.mxu0 0.0
        %782 = vmatpush1.msra.mxu0 0.0
        %783 = vmatprep.subr.mxu0 0.0
        %784 = vmatpush1.msra.mxu0 0.0
        %785 = vmatprep.subr.mxu0 0.0
        %786 = vmatpush1.msra.mxu0 0.0
        %787 = vmatprep.subr.mxu0 0.0
        %788 = vmatpush1.msra.mxu0 0.0
        %789 = vmatprep.subr.mxu0 0.0
        %790 = vmatpush1.msra.mxu0 0.0
        %791 = vmatprep.subr.mxu0 0.0
        %792 = vmatpush1.msra.mxu0 0.0
        %793 = vmatprep.subr.mxu0 0.0
        %794 = vmatpush1.msra.mxu0 0.0
        %795 = vmatprep.mubr.f32.mxu0 0.0
        %796 = vmatmul.mubr.f32.gmra.mrb[0].mxu0 %v518
        %v797 = vpop.f32.mrb[0].mxu0
        %v798 = vadd.f32 %v500, %v797
        %v799 = vpop.f32.mrb[0].mxu0
        %v800 = vadd.f32 %v500, %v799
        %801 = vmatprep.mubr.f32.mxu0 0.0
        %802 = vmatmul.mubr.f32.gmra.mrb[0].mxu0 %v521
        %v803 = vpop.f32.mrb[0].mxu0
        %v804 = vadd.f32 %v505, %v803
        %v805 = vpop.f32.mrb[0].mxu0
        %v806 = vadd.f32 %v505, %v805
        %807 = vmatprep.mubr.f32.mxu0 0.0
        %808 = vmatmul.mubr.f32.gmra.mrb[0].mxu0 %v524
        %v809 = vpop.f32.mrb[0].mxu0
        %v810 = vadd.f32 %v510, %v809
        %v811 = vpop.f32.mrb[0].mxu0
        %v812 = vadd.f32 %v510, %v811
        %813 = vmatprep.mubr.f32.mxu0 0.0
        %814 = vmatmul.mubr.f32.gmra.mrb[0].mxu0 %v527
        %v815 = vpop.f32.mrb[0].mxu0
        %v816 = vadd.f32 %v515, %v815
        %v817 = vpop.f32.mrb[0].mxu0
        %v818 = vadd.f32 %v515, %v817
        %819 = vdwg.mxu0
        %v820 = vmax.f32 %v798, 0.0
        %v821 = vmax.f32 %v800, 0.0
        %v822 = vmax.f32 %v804, 0.0
        %v823 = vmax.f32 %v806, 0.0
        %v824 = vmax.f32 %v810, 0.0
        %v825 = vmax.f32 %v812, 0.0
        %v826 = vmax.f32 %v816, 0.0
        %v827 = vmax.f32 %v818, 0.0
        %v828 = vmul.f32 %v343, %v820
        %v829 = vmul.f32 %v344, %v821
        %v830 = vmul.f32 %v345, %v822
        %v831 = vmul.f32 %v346, %v823
        %v832 = vmul.f32 %v347, %v824
        %v833 = vmul.f32 %v348, %v825
        %v834 = vmul.f32 %v349, %v826
        %v835 = vmul.f32 %v350, %v827
        %v836 = vadd.f32 %v626, %v828
        %v837 = vadd.f32 %v627, %v829
        %v838 = vadd.f32 %v628, %v830
        %v839 = vadd.f32 %v629, %v831
        %v840 = vadd.f32 %v630, %v832
        %v841 = vadd.f32 %v631, %v833
        %v842 = vadd.f32 %v632, %v834
        %v843 = vadd.f32 %v633, %v835
        %844 = vst [vmem:[%s331] sm:$0xff] %v836
        %845 = vst [vmem:[%s331 + $0x8] sm:$0xff] %v837
        %846 = vst [vmem:[%s331 + $0x10] sm:$0xff] %v838
        %847 = vst [vmem:[%s331 + $0x18] sm:$0xff] %v839
        %848 = vst [vmem:[%s331 + $0x20] sm:$0xff] %v840
        %849 = vst [vmem:[%s331 + $0x28] sm:$0xff] %v841
        %850 = vst [vmem:[%s331 + $0x30] sm:$0xff] %v842
        %851 = vst [vmem:[%s331 + $0x38] sm:$0xff] %v843
        %s852 = sand.u32 %s188, 1
        %s853 = scalar_lea.sflag [#allocation4], %s852
        %s854 = sand.u32 %s188, 1
        %s855 = smul.addr %s854, 64
        %s856 = scalar_lea.vmem [#allocation7], %s855
        // Predicated region
        $region53: #{tpu_custom_call.1} parent=43 // pred_check
          %p857 = pneg %p198
        $region54: #{tpu_custom_call.1} parent=43 // pred_check_branch
          %859 = sbr.rel (%p857) target = $region56
        $region55: #{tpu_custom_call.1} parent=43 // pred_region
          %s860 = smul.u32 2, %s31
          %s862 = ssub.s32 1024, 1024
          %863 = vsyncadd %s853, %s862
          %s864 = smul.addr %s30, 8
          %s865 = sadd.s32 %s860, %s864
          %s866 = smul.addr %s865, 128
          %s867 = scalar_lea.hbm %s6, %s866
          %s868 = sshll.u32 %s856, 4
          %s869 = int_to_ptr.vmem [resolvable:$true] %s868
          %874 = dma.vmem_to_hbm [thread:$0]  %s869, 1024, %s867, %s853, 256, 256, 16
        $region56: #{tpu_custom_call.1} parent=43 // pred_fallthru
          _
      $region44: #{tpu_custom_call.1} parent=5 // pred_fallthru
        _
      %p875 = scmp.le.s32.totalorder 2, %s21
      // Predicated region
      $region57: #{tpu_custom_call.1} parent=5 // pred_check
        %p876 = pneg %p875
      $region58: #{tpu_custom_call.1} parent=5 // pred_check_branch
        %878 = sbr.rel (%p876) target = $region60
      $region59: #{tpu_custom_call.1} parent=5 // pred_region
        %s879 = ssub.s32 %s21, 2
        // Predicated region
        $region61: #{tpu_custom_call.1} parent=59 // pred_check
          %p880 = pneg %p204
        $region62: #{tpu_custom_call.1} parent=59 // pred_check_branch
          %882 = sbr.rel (%p880) target = $region64
        $region63: #{tpu_custom_call.1} parent=59 // pred_region
          %s883 = sand.u32 %s189, 1
          %s884 = scalar_lea.sflag [#allocation4], %s883
          %s885 = sand.u32 %s189, 1
          %s886 = smul.addr %s885, 64
          %s887 = scalar_lea.vmem [#allocation7], %s886
          %888 = dma.done %s884, 1024
        $region64: #{tpu_custom_call.1} parent=59 // pred_fallthru
          _
      $region60: #{tpu_custom_call.1} parent=5 // pred_fallthru
        _
    $region6: #{tpu_custom_call.1} parent=1 // loop_footer
      %s25 = sadd.s32 1, %s21
    $region7: #{tpu_custom_call.1} parent=1 // loop_footer_branch
      %20 = sbr.rel target = $region3
    $region8: #{tpu_custom_call.1} parent=1 // loop_exit
      _
    %889 = vsyncpa [#allocation3], 1
    %s890 = scalar_lea.sflag [#allocation3], 1
    %891 = vsyncpa %s890, 1
    %892 = vsyncpa [#allocation6], 1
    %s893 = scalar_lea.sflag [#allocation6], 1
    %894 = vsyncpa %s893, 1
    %895 = vsyncpa [#allocation4], 1
    %s896 = scalar_lea.sflag [#allocation4], 1
    %897 = vsyncpa %s896, 1

</llo_original>
